<compile_context>
chip_gen: v5e
topology: v5e:2x2
jax: 0.10.0
libtpu: 0.0.40
codegen_flags: <defaults>
</compile_context>

<pallas_src>
import functools

import jax
import jax.numpy as jnp
from jax.experimental import pallas as pl
from jax.experimental.pallas import tpu as pltpu


def _round_up(x, m):
    return (x + m - 1) // m * m


def _attn_core_kernel(maxlen_ref, mem_ref, scq_ref, wk_ref, kvec_ref, ctx_ref):
    """Attention core for one tile of Bt batch rows.

    mem_ref : (Bt, Lp, Dp)  bf16  position-weighted memory (rows >= mem_len are 0)
    scq_ref : (Bt, 1)       f32   query half of the mlp score, per batch row
    wk_ref  : (Dp, Dp)      bf16  Wk pre-transposed to (in, out)
    kvec_ref: (2, Dp)       f32   row 0 = bk, row 1 = key half of the mlp weight
    ctx_ref : (Bt, Dp)      f32   attention output (score @ kx), pre-projection
    """
    bt, lp, dp = mem_ref.shape
    max_len = maxlen_ref[0]                       # i32 scalar from SMEM

    mem = mem_ref[...]                            # (Bt, Lp, Dp) bf16
    mem2d = mem.reshape(bt * lp, dp)              # free reshape (Lp % 16 == 0)

    bk = kvec_ref[0:1, :]                         # (1, Dp) f32
    w_k = kvec_ref[1:2, :]                        # (1, Dp) f32

    # keys: kx = memory @ Wk^T + bk   -- single big MXU matmul, M = Bt*Lp
    kx2d = jnp.dot(mem2d, wk_ref[...],
                   preferred_element_type=jnp.float32) + bk        # (Bt*Lp, Dp) f32
    kx = kx2d.reshape(bt, lp, dp)                                   # (Bt, Lp, Dp)

    # key half of the mlp score: VPU multiply + lane reduce (keeps the MXU free)
    sc_k = jnp.sum(kx * w_k, axis=-1)                               # (Bt, Lp) f32

    # score = tanh(sc_k + sc_q); positions >= batch max length don't exist in the
    # reference (SqueezeEmbedding truncates), so mask them out of the softmax.
    score = jnp.tanh(sc_k + scq_ref[...])                           # (Bt, Lp)
    col = jax.lax.broadcasted_iota(jnp.int32, score.shape, 1)
    score = jnp.where(col < max_len, score, -1e30)
    score = score - jnp.max(score, axis=-1, keepdims=True)
    p = jnp.exp(score)
    attn = p * pl.reciprocal(jnp.sum(p, axis=-1, keepdims=True), approx=True)

    # context: batched (1, Lp) @ (Lp, Dp) contraction on the MXU
    ctx = jax.lax.dot_general(
        attn[:, None, :], kx,
        dimension_numbers=(((2,), (1,)), ((0,), (0,))),
        preferred_element_type=jnp.float32)                         # (Bt, 1, Dp)
    ctx_ref[...] = ctx.reshape(bt, dp)


def base_c_forward(text_idx, aspect_idx, left_idx, params, *, hops,
                   compute_dtype=jnp.bfloat16):
    emb = params["embedding"]                    # (V, D) f32
    D = emb.shape[1]
    B, L = text_idx.shape
    Dp = _round_up(D, 128)
    Lp = _round_up(L, 16)

    # ---------------- plain-JAX glue (fused by XLA) ----------------
    memory_len = jnp.sum(text_idx != 0, axis=-1).astype(jnp.int32)
    aspect_len = jnp.sum(aspect_idx != 0, axis=-1).astype(jnp.int32)
    left_len = jnp.sum(left_idx != 0, axis=-1).astype(jnp.int32)
    max_len = jnp.max(memory_len).astype(jnp.int32)

    mem_len_safe = jnp.maximum(memory_len, 1)    # guard 0-length inputs
    asp_len_safe = jnp.maximum(aspect_len, 1)

    memory_full = jnp.take(emb, text_idx, axis=0)        # (B, L, D)
    aspect_emb = jnp.take(emb, aspect_idx, axis=0)       # (B, La, D)
    x0 = jnp.sum(aspect_emb, axis=1) / asp_len_safe.astype(jnp.float32)[:, None]
    v_s = jnp.sum(memory_full, axis=1) / mem_len_safe.astype(jnp.float32)[:, None]

    # position-dependent down-weighting (locationed_memory), vectorised; rows
    # beyond each sample's length are zeroed (== SqueezeEmbedding's zero padding).
    pos = jnp.arange(L, dtype=jnp.int32)[None, :]
    pos_f = pos.astype(jnp.float32)
    a_start = (left_len - aspect_len).astype(jnp.float32)[:, None]
    a_end = left_len.astype(jnp.float32)[:, None]
    dist = jnp.where(pos_f < a_start, a_start - pos_f,
                     jnp.where(pos_f <= a_end, 0.0, pos_f - a_end))
    w_pos = 1.0 - dist / mem_len_safe.astype(jnp.float32)[:, None]
    w_pos = jnp.where(pos < memory_len[:, None], w_pos, 0.0)        # (B, L)
    mem_located = memory_full * w_pos[:, :, None]                   # fused w/ gather

    # query-side chain, hoisted out of the kernel and batched over B:
    # hops applications of the bias-free x_linear, then the query projection and
    # the query half of the mlp score (a single scalar per batch row).
    x = x0
    for _ in range(hops):
        x = x @ params["wx"].T
    qx = x @ params["wq"].T + params["bq"]
    sc_q = jnp.sum(qx * params["attw"][1][None, :], axis=-1, keepdims=True)  # (B,1)

    # ---------------- pad / cast operands for the kernel ----------------
    Bt = min(_round_up(B, 8), 64)                # batch tile per grid step
    Bp = _round_up(B, Bt)

    mem_k = jnp.pad(mem_located,
                    ((0, Bp - B), (0, Lp - L), (0, Dp - D))).astype(compute_dtype)
    scq_k = jnp.pad(sc_q, ((0, Bp - B), (0, 0))).astype(jnp.float32)
    wk_t = jnp.pad(params["wk"].T, ((0, Dp - D), (0, Dp - D))).astype(compute_dtype)
    kvec = jnp.pad(jnp.stack([params["bk"], params["attw"][0]], axis=0),
                   ((0, 0), (0, Dp - D))).astype(jnp.float32)       # (2, Dp)
    maxlen_arr = jnp.reshape(max_len, (1,)).astype(jnp.int32)       # -> SMEM

    grid_spec = pltpu.PrefetchScalarGridSpec(
        num_scalar_prefetch=1,
        grid=(Bp // Bt,),
        in_specs=[
            pl.BlockSpec((Bt, Lp, Dp), lambda i, m: (i, 0, 0)),     # memory tile
            pl.BlockSpec((Bt, 1), lambda i, m: (i, 0)),             # sc_q tile
            pl.BlockSpec((Dp, Dp), lambda i, m: (0, 0)),            # Wk^T
            pl.BlockSpec((2, Dp), lambda i, m: (0, 0)),             # [bk; w_k]
        ],
        out_specs=pl.BlockSpec((Bt, Dp), lambda i, m: (i, 0)),
    )

    ctx_p = pl.pallas_call(
        _attn_core_kernel,
        grid_spec=grid_spec,
        out_shape=jax.ShapeDtypeStruct((Bp, Dp), jnp.float32),
        compiler_params=pltpu.CompilerParams(
            dimension_semantics=("parallel",)),
    )(maxlen_arr, mem_k, scq_k, wk_t, kvec)

    ctx = ctx_p[:B, :D]                                             # (B, D) f32

    # post-context projections: batched (B, D) XLA matmuls (were M=1 per step).
    v_ts = ctx @ params["wp"].T + params["bp"]
    v_ns = v_ts + v_s
    v_ms = jnp.tanh(v_ns @ params["wmlp"].T + params["bmlp"])
    logits = v_ms @ params["wd"].T + params["bd"]
    return jax.nn.softmax(logits, axis=-1)                          # exact softmax


if __name__ == "__main__":
    VOCAB, D, B, L, P, HOPS = 50, 32, 2, 16, 3, 2
    A_LEN, LEFT_LEN = 4, 8

    key = jax.random.PRNGKey(0)
    keys = jax.random.split(key, 20)
    k_emb, k_txt, k_asp, k_left = keys[0], keys[1], keys[2], keys[3]
    kw = keys[4:]

    mem_lens = jnp.array([12, 9])
    asp_lens = jnp.array([2, 1])
    left_lens = jnp.array([5, 4])

    def make_idx(k, shape, lens):
        idx = jax.random.randint(k, shape, 1, VOCAB)
        pos = jnp.arange(shape[1])[None, :]
        return jnp.where(pos < lens[:, None], idx, 0).astype(jnp.int32)

    text_raw_indices = make_idx(k_txt, (B, L), mem_lens)
    aspect_indices = make_idx(k_asp, (B, A_LEN), asp_lens)
    left_with_aspect_indices = make_idx(k_left, (B, LEFT_LEN), left_lens)

    emb = jax.random.normal(k_emb, (VOCAB, D), jnp.float32) * 0.5
    emb = emb.at[0].set(0.0)                      # padding row

    def lin_w(k, out_dim, in_dim, scale=0.2):
        return jax.random.normal(k, (out_dim, in_dim), jnp.float32) * scale

    params = {
        "embedding": emb,
        "wx": lin_w(kw[0], D, D),                                     # x_linear (no bias)
        "wk": lin_w(kw[1], D, D), "bk": jax.random.normal(kw[2], (D,)) * 0.1,
        "wq": lin_w(kw[3], D, D), "bq": jax.random.normal(kw[4], (D,)) * 0.1,
        "attw": jax.random.normal(kw[5], (2, D), jnp.float32) * 0.2,  # mlp-score [w_k; w_q]
        "wp": lin_w(kw[6], D, D), "bp": jax.random.normal(kw[7], (D,)) * 0.1,
        "wmlp": lin_w(kw[8], D, D), "bmlp": jax.random.normal(kw[9], (D,)) * 0.1,
        "wd": lin_w(kw[10], P, D), "bd": jax.random.normal(kw[11], (P,)) * 0.1,
    }
    # s_linear exists in the torch module but its output is never used in forward().

    fwd = jax.jit(functools.partial(base_c_forward, hops=HOPS))
    out = jax.block_until_ready(
        fwd(text_raw_indices, aspect_indices, left_with_aspect_indices, params))

    assert out.shape == (B, P)
    assert bool(jnp.all(jnp.isfinite(out)))
    assert bool(jnp.all(jnp.abs(jnp.sum(out, axis=-1) - 1.0) < 1e-5))
    print("KERNEL_OK")
</pallas_src>

<mosaic_0001>
module attributes {stable_mosaic.version = 11 : i64} {
  func.func @_attn_core_kernel(%arg0: i32, %arg1: memref<1xi32, #tpu.memory_space<smem>>, %arg2: memref<8x16x128xbf16, #tpu.memory_space<vmem>>, %arg3: memref<8x1xf32, #tpu.memory_space<vmem>>, %arg4: memref<128x128xbf16, #tpu.memory_space<vmem>>, %arg5: memref<2x128xf32, #tpu.memory_space<vmem>>, %arg6: memref<8x128xf32, #tpu.memory_space<vmem>>) attributes {dimension_semantics = [#tpu.dimension_semantics<parallel>], iteration_bounds = array<i64: 1>, scalar_prefetch = 1 : i64, scratch_operands = 0 : i64, tpu.core_type = #tpu.core_type<tc>, window_params = [{transform_indices = @transform_0, window_bounds = array<i64: 8, 16, 128>}, {transform_indices = @transform_1, window_bounds = array<i64: 8, 1>}, {pipeline_mode = #tpu.pipeline_mode<synchronous>, transform_indices = @transform_2, window_bounds = array<i64: 128, 128>}, {pipeline_mode = #tpu.pipeline_mode<synchronous>, transform_indices = @transform_3, window_bounds = array<i64: 2, 128>}, {transform_indices = @transform_4, window_bounds = array<i64: 8, 128>}]} {
    %c0 = arith.constant 0 : index
    %0 = memref.load %arg1[%c0] : memref<1xi32, #tpu.memory_space<smem>>
    %c0_0 = arith.constant 0 : index
    %c0_1 = arith.constant 0 : index
    %c0_2 = arith.constant 0 : index
    %1 = vector.load %arg2[%c0_0, %c0_1, %c0_2] : memref<8x16x128xbf16, #tpu.memory_space<vmem>>, vector<8x16x128xbf16>
    %2 = vector.shape_cast %1 : vector<8x16x128xbf16> to vector<128x128xbf16>
    %c0_3 = arith.constant 0 : index
    %c0_4 = arith.constant 0 : index
    %3 = vector.load %arg5[%c0_3, %c0_4] : memref<2x128xf32, #tpu.memory_space<vmem>>, vector<1x128xf32>
    %c1 = arith.constant 1 : index
    %c0_5 = arith.constant 0 : index
    %4 = vector.load %arg5[%c1, %c0_5] : memref<2x128xf32, #tpu.memory_space<vmem>>, vector<1x128xf32>
    %c0_6 = arith.constant 0 : index
    %c0_7 = arith.constant 0 : index
    %5 = vector.load %arg4[%c0_6, %c0_7] : memref<128x128xbf16, #tpu.memory_space<vmem>>, vector<128x128xbf16>
    %cst = arith.constant dense<0.000000e+00> : vector<128x128xf32>
    %6 = tpu.matmul %2, %5, %cst {dimension_numbers = #tpu.dot_dimension_numbers<[1], [0], [0], [1], [0, 0, 1, 1], [], []>} : vector<128x128xbf16>, vector<128x128xbf16>, vector<128x128xf32> -> vector<128x128xf32>
    %7 = vector.broadcast %3 : vector<1x128xf32> to vector<128x128xf32>
    %8 = arith.addf %6, %7 : vector<128x128xf32>
    %9 = vector.shape_cast %8 : vector<128x128xf32> to vector<8x16x128xf32>
    %10 = vector.shape_cast %4 : vector<1x128xf32> to vector<1x1x128xf32>
    %11 = vector.broadcast %10 : vector<1x1x128xf32> to vector<8x16x128xf32>
    %12 = arith.mulf %9, %11 : vector<8x16x128xf32>
    %cst_8 = arith.constant dense<0.000000e+00> : vector<8x16xf32>
    %13 = vector.multi_reduction <add>, %12, %cst_8 [2] : vector<8x16x128xf32> to vector<8x16xf32>
    %c0_9 = arith.constant 0 : index
    %c0_10 = arith.constant 0 : index
    %14 = vector.load %arg3[%c0_9, %c0_10] : memref<8x1xf32, #tpu.memory_space<vmem>>, vector<8x1xf32>
    %15 = vector.broadcast %14 : vector<8x1xf32> to vector<8x16xf32>
    %16 = arith.addf %13, %15 : vector<8x16xf32>
    %17 = math.tanh %16 : vector<8x16xf32>
    %18 = tpu.iota {dimensions = array<i32: 1>} : vector<8x16xi32>
    %19 = vector.broadcast %0 : i32 to vector<8x16xi32>
    %20 = arith.cmpi slt, %18, %19 : vector<8x16xi32>
    %cst_11 = arith.constant -1.000000e+30 : f32
    %21 = vector.broadcast %cst_11 : f32 to vector<8x16xf32>
    %22 = arith.select %20, %17, %21 : vector<8x16xi1>, vector<8x16xf32>
    %cst_12 = arith.constant dense<0xFF800000> : vector<8xf32>
    %23 = vector.multi_reduction <maximumf>, %22, %cst_12 [1] : vector<8x16xf32> to vector<8xf32>
    %24 = vector.shape_cast %23 : vector<8xf32> to vector<8x1xf32>
    %25 = vector.broadcast %24 : vector<8x1xf32> to vector<8x16xf32>
    %26 = arith.subf %22, %25 : vector<8x16xf32>
    %27 = math.exp %26 : vector<8x16xf32>
    %cst_13 = arith.constant dense<0.000000e+00> : vector<8xf32>
    %28 = vector.multi_reduction <add>, %27, %cst_13 [1] : vector<8x16xf32> to vector<8xf32>
    %29 = vector.shape_cast %28 : vector<8xf32> to vector<8x1xf32>
    %30 = tpu.reciprocal %29 {approx = true} : vector<8x1xf32> -> vector<8x1xf32>
    %31 = vector.broadcast %30 : vector<8x1xf32> to vector<8x16xf32>
    %32 = arith.mulf %27, %31 : vector<8x16xf32>
    %33 = vector.shape_cast %32 : vector<8x16xf32> to vector<8x1x16xf32>
    %cst_14 = arith.constant dense<0.000000e+00> : vector<8x1x128xf32>
    %34 = tpu.matmul %33, %9, %cst_14 {dimension_numbers = #tpu.dot_dimension_numbers<[2], [1], [1], [2], [0, 0, 0, 1, 1, 2], [0], [0]>} : vector<8x1x16xf32>, vector<8x16x128xf32>, vector<8x1x128xf32> -> vector<8x1x128xf32>
    %35 = vector.shape_cast %34 : vector<8x1x128xf32> to vector<8x128xf32>
    %c0_15 = arith.constant 0 : index
    %c0_16 = arith.constant 0 : index
    %36 = vector.load %arg6[%c0_15, %c0_16] : memref<8x128xf32, #tpu.memory_space<vmem>>, vector<8x128xf32>
    tpu.vector_store %arg6[%c0_15, %c0_16], %35 {strides = array<i32>} : memref<8x128xf32, #tpu.memory_space<vmem>>, vector<8x128xf32>,
    return
  }
  func.func @transform_0(%arg0: i32, %arg1: memref<1xi32, #tpu.memory_space<smem>>) -> (i32, i32, i32) {
    %c0_i32 = arith.constant 0 : i32
    %c0_i32_0 = arith.constant 0 : i32
    %c0_i32_1 = arith.constant 0 : i32
    return %arg0, %c0_i32, %c0_i32_0 : i32, i32, i32
  }
  func.func @transform_1(%arg0: i32, %arg1: memref<1xi32, #tpu.memory_space<smem>>) -> (i32, i32) {
    %c0_i32 = arith.constant 0 : i32
    %c0_i32_0 = arith.constant 0 : i32
    return %arg0, %c0_i32 : i32, i32
  }
  func.func @transform_2(%arg0: i32, %arg1: memref<1xi32, #tpu.memory_space<smem>>) -> (i32, i32) {
    %c0_i32 = arith.constant 0 : i32
    %c0_i32_0 = arith.constant 0 : i32
    %c0_i32_1 = arith.constant 0 : i32
    return %c0_i32, %c0_i32_0 : i32, i32
  }
  func.func @transform_3(%arg0: i32, %arg1: memref<1xi32, #tpu.memory_space<smem>>) -> (i32, i32) {
    %c0_i32 = arith.constant 0 : i32
    %c0_i32_0 = arith.constant 0 : i32
    %c0_i32_1 = arith.constant 0 : i32
    return %c0_i32, %c0_i32_0 : i32, i32
  }
  func.func @transform_4(%arg0: i32, %arg1: memref<1xi32, #tpu.memory_space<smem>>) -> (i32, i32) {
    %c0_i32 = arith.constant 0 : i32
    %c0_i32_0 = arith.constant 0 : i32
    return %arg0, %c0_i32 : i32, i32
  }
}

</mosaic_0001>

<llo_original>
// kernel: base_c_forward.1
$region0: #{base_c_forward.1}
  #allocation0 [shape = 'u32[]', space=smem, size = 0x4, offset = 0x4, fixed_abs, tag = 'smem constant byte address 0x4 - core index']
  #allocation1 [shape = 'u32[72,128]{1,0:T(1,128)}', space=vmem, size = 0x9000, scoped, tag = 'internal scratch']
  #allocation2 [shape = 's32[1]{0}', space=sflag, size = 0x4, scoped, tag = 'scoped memory for base_c_forward.1']
  #allocation3 [shape = 's32[1]{0:T(128)S(6)}', space=smem, size = 0x200, scoped, tag = 'prefetched SMEM operand 0']
  %s0 = inlined_call_operand.<no memory space> [shape: s32[1], index: 0, kind: input, shape index: {}]
  %s1 = inlined_call_operand.vmem [shape: bf16[8,16,128], index: 1, kind: input, shape index: {}]
  %s2 = inlined_call_operand.vmem [shape: f32[8,1], index: 2, kind: input, shape index: {}]
  %s3 = inlined_call_operand.vmem [shape: bf16[128,128], index: 3, kind: input, shape index: {}]
  %s4 = inlined_call_operand.vmem [shape: f32[2,128], index: 4, kind: input, shape index: {}]
  %s5 = inlined_call_operand.vmem [shape: f32[8,128], index: 5, kind: output, shape index: {}]
  %s6 = sld [smem:[#allocation0]]
  $region26: #{base_c_forward.1} parent=0
    _
  %s8 = ssub.s32 1, %s6
  %s9 = scalar_select 0, %s8, %s6
  %10 = sst [smem:[#allocation3]] %s0
  // Predicated region
  $region2: #{base_c_forward.1} parent=0 // pred_check
    _
  $region3: #{base_c_forward.1} parent=0 // pred_check_branch
    %12 = sbr.rel (0) target = $region5
  $region4: #{base_c_forward.1} parent=0 // pred_region
    _
  $region5: #{base_c_forward.1} parent=0 // pred_fallthru
    _
  // Predicated region
  $region6: #{base_c_forward.1} parent=0 // pred_check
    _
  $region7: #{base_c_forward.1} parent=0 // pred_check_branch
    %14 = sbr.rel (0) target = $region9
  $region8: #{base_c_forward.1} parent=0 // pred_region
    _
  $region9: #{base_c_forward.1} parent=0 // pred_fallthru
    _
  // Predicated region
  $region10: #{base_c_forward.1} parent=0 // pred_check
    _
  $region11: #{base_c_forward.1} parent=0 // pred_check_branch
    %16 = sbr.rel (0) target = $region13
  $region12: #{base_c_forward.1} parent=0 // pred_region
    _
  $region13: #{base_c_forward.1} parent=0 // pred_fallthru
    _
  // Predicated region
  $region14: #{base_c_forward.1} parent=0 // pred_check
    _
  $region15: #{base_c_forward.1} parent=0 // pred_check_branch
    %18 = sbr.rel (0) target = $region17
  $region16: #{base_c_forward.1} parent=0 // pred_region
    _
  $region17: #{base_c_forward.1} parent=0 // pred_fallthru
    _
  %s19 = sld [smem:[#allocation3]]
  %v20 = vld [vmem:[%s1] sm:$0xf]
  %v21 = vld [vmem:[%s1 + $0x4] sm:$0xf]
  %v22 = vld [vmem:[%s1 + $0x8] sm:$0xf]
  %v23 = vld [vmem:[%s1 + $0xc] sm:$0xf]
  %v24 = vld [vmem:[%s1 + $0x10] sm:$0xf]
  %v25 = vld [vmem:[%s1 + $0x14] sm:$0xf]
  %v26 = vld [vmem:[%s1 + $0x18] sm:$0xf]
  %v27 = vld [vmem:[%s1 + $0x1c] sm:$0xf]
  %v28 = vld [vmem:[%s1 + $0x20] sm:$0xf]
  %v29 = vld [vmem:[%s1 + $0x24] sm:$0xf]
  %v30 = vld [vmem:[%s1 + $0x28] sm:$0xf]
  %v31 = vld [vmem:[%s1 + $0x2c] sm:$0xf]
  %v32 = vld [vmem:[%s1 + $0x30] sm:$0xf]
  %v33 = vld [vmem:[%s1 + $0x34] sm:$0xf]
  %v34 = vld [vmem:[%s1 + $0x38] sm:$0xf]
  %v35 = vld [vmem:[%s1 + $0x3c] sm:$0xf]
  %v36 = vld [vmem:[%s4] sm:$0x1]
  %v37 = vld [vmem:[%s4 + $0x1] sm:$0x1]
  %v38 = vld [vmem:[%s3] sm:$0xf]
  %v39 = vld [vmem:[%s3 + $0x4] sm:$0xf]
  %v40 = vld [vmem:[%s3 + $0x8] sm:$0xf]
  %v41 = vld [vmem:[%s3 + $0xc] sm:$0xf]
  %v42 = vld [vmem:[%s3 + $0x10] sm:$0xf]
  %v43 = vld [vmem:[%s3 + $0x14] sm:$0xf]
  %v44 = vld [vmem:[%s3 + $0x18] sm:$0xf]
  %v45 = vld [vmem:[%s3 + $0x1c] sm:$0xf]
  %v46 = vld [vmem:[%s3 + $0x20] sm:$0xf]
  %v47 = vld [vmem:[%s3 + $0x24] sm:$0xf]
  %v48 = vld [vmem:[%s3 + $0x28] sm:$0xf]
  %v49 = vld [vmem:[%s3 + $0x2c] sm:$0xf]
  %v50 = vld [vmem:[%s3 + $0x30] sm:$0xf]
  %v51 = vld [vmem:[%s3 + $0x34] sm:$0xf]
  %v52 = vld [vmem:[%s3 + $0x38] sm:$0xf]
  %v53 = vld [vmem:[%s3 + $0x3c] sm:$0xf]
  %v54 = vperm.slane %v36, 0
  %v71 = vunpack.c.l.b16 %v20
  %v72 = vunpack.c.l.b16 %v21
  %v73 = vunpack.c.l.b16 %v22
  %v74 = vunpack.c.l.b16 %v23
  %v75 = vunpack.c.l.b16 %v24
  %v76 = vunpack.c.l.b16 %v25
  %v77 = vunpack.c.l.b16 %v26
  %v78 = vunpack.c.l.b16 %v27
  %v79 = vunpack.c.l.b16 %v28
  %v80 = vunpack.c.l.b16 %v29
  %v81 = vunpack.c.l.b16 %v30
  %v82 = vunpack.c.l.b16 %v31
  %v83 = vunpack.c.l.b16 %v32
  %v84 = vunpack.c.l.b16 %v33
  %v85 = vunpack.c.l.b16 %v34
  %v86 = vunpack.c.l.b16 %v35
  %v87 = vpack.c.b16 %v72, %v71
  %v88 = vpack.c.b16 %v74, %v73
  %v89 = vpack.c.b16 %v76, %v75
  %v90 = vpack.c.b16 %v78, %v77
  %v91 = vpack.c.b16 %v80, %v79
  %v92 = vpack.c.b16 %v82, %v81
  %v93 = vpack.c.b16 %v84, %v83
  %v94 = vpack.c.b16 %v86, %v85
  %v119 = vunpack.c.l.b16 %v38
  %v120 = vunpack.c.l.b16 %v39
  %v121 = vunpack.c.l.b16 %v40
  %v122 = vunpack.c.l.b16 %v41
  %v123 = vunpack.c.l.b16 %v42
  %v124 = vunpack.c.l.b16 %v43
  %v125 = vunpack.c.l.b16 %v44
  %v126 = vunpack.c.l.b16 %v45
  %v127 = vunpack.c.l.b16 %v46
  %v128 = vunpack.c.l.b16 %v47
  %v129 = vunpack.c.l.b16 %v48
  %v130 = vunpack.c.l.b16 %v49
  %v131 = vunpack.c.l.b16 %v50
  %v132 = vunpack.c.l.b16 %v51
  %v133 = vunpack.c.l.b16 %v52
  %v134 = vunpack.c.l.b16 %v53
  %v135 = vpack.c.b16 %v120, %v119
  %v136 = vpack.c.b16 %v122, %v121
  %v137 = vpack.c.b16 %v124, %v123
  %v138 = vpack.c.b16 %v126, %v125
  %v139 = vpack.c.b16 %v128, %v127
  %v140 = vpack.c.b16 %v130, %v129
  %v141 = vpack.c.b16 %v132, %v131
  %v142 = vpack.c.b16 %v134, %v133
  %151 = vmatpush.bf16.msra.mxu0 %v142
  %152 = vmatpush.bf16.msra.mxu0 %v141
  %153 = vmatpush.bf16.msra.mxu0 %v140
  %154 = vmatpush.bf16.msra.mxu0 %v139
  %155 = vmatpush.bf16.msra.mxu0 %v138
  %156 = vmatpush.bf16.msra.mxu0 %v137
  %157 = vmatpush.bf16.msra.mxu0 %v136
  %158 = vmatpush.bf16.msra.mxu0 %v135
  %159 = vmatmul.bf16.gmra.mxu0 %v87
  %v160 = vpop.f32.mrf.mxu0
  %v161 = vadd.f32 %v54, %v160
  %v162 = vpop.f32.mrf.mxu0
  %v163 = vadd.f32 %v54, %v162
  %164 = vmatmul.bf16.gmra.mxu0 %v88
  %v165 = vpop.f32.mrf.mxu0
  %v166 = vadd.f32 %v54, %v165
  %v167 = vpop.f32.mrf.mxu0
  %v168 = vadd.f32 %v54, %v167
  %169 = vmatmul.bf16.gmra.mxu0 %v89
  %v170 = vpop.f32.mrf.mxu0
  %v171 = vadd.f32 %v54, %v170
  %v172 = vpop.f32.mrf.mxu0
  %v173 = vadd.f32 %v54, %v172
  %174 = vmatmul.bf16.gmra.mxu0 %v90
  %v175 = vpop.f32.mrf.mxu0
  %v176 = vadd.f32 %v54, %v175
  %v177 = vpop.f32.mrf.mxu0
  %v178 = vadd.f32 %v54, %v177
  %179 = vmatmul.bf16.gmra.mxu0 %v91
  %v180 = vpop.f32.mrf.mxu0
  %v181 = vadd.f32 %v54, %v180
  %v182 = vpop.f32.mrf.mxu0
  %v183 = vadd.f32 %v54, %v182
  %184 = vmatmul.bf16.gmra.mxu0 %v92
  %v185 = vpop.f32.mrf.mxu0
  %v186 = vadd.f32 %v54, %v185
  %v187 = vpop.f32.mrf.mxu0
  %v188 = vadd.f32 %v54, %v187
  %189 = vmatmul.bf16.gmra.mxu0 %v93
  %v190 = vpop.f32.mrf.mxu0
  %v191 = vadd.f32 %v54, %v190
  %v192 = vpop.f32.mrf.mxu0
  %v193 = vadd.f32 %v54, %v192
  %194 = vmatmul.bf16.gmra.mxu0 %v94
  %v195 = vpop.f32.mrf.mxu0
  %v196 = vadd.f32 %v54, %v195
  %v197 = vpop.f32.mrf.mxu0
  %v198 = vadd.f32 %v54, %v197
  %199 = vdwg.mxu0
  %v200 = vperm.slane %v37, 0
  %v201 = vmul.f32 %v161, %v200
  %v202 = vmul.f32 %v163, %v200
  %v203 = vmul.f32 %v166, %v200
  %v204 = vmul.f32 %v168, %v200
  %v205 = vmul.f32 %v171, %v200
  %v206 = vmul.f32 %v173, %v200
  %v207 = vmul.f32 %v176, %v200
  %v208 = vmul.f32 %v178, %v200
  %v209 = vmul.f32 %v181, %v200
  %v210 = vmul.f32 %v183, %v200
  %v211 = vmul.f32 %v186, %v200
  %v212 = vmul.f32 %v188, %v200
  %v213 = vmul.f32 %v191, %v200
  %v214 = vmul.f32 %v193, %v200
  %v215 = vmul.f32 %v196, %v200
  %v216 = vmul.f32 %v198, %v200
  %217 = vadd.xlane.f32.xlu0 %v201
  %v218 = vpop.xlane.xlu0 %217
  %219 = vadd.xlane.f32.xlu0 %v202
  %v220 = vpop.xlane.xlu0 %219
  %221 = vadd.xlane.f32.xlu0 %v203
  %v222 = vpop.xlane.xlu0 %221
  %223 = vadd.xlane.f32.xlu0 %v204
  %v224 = vpop.xlane.xlu0 %223
  %225 = vadd.xlane.f32.xlu0 %v205
  %v226 = vpop.xlane.xlu0 %225
  %227 = vadd.xlane.f32.xlu0 %v206
  %v228 = vpop.xlane.xlu0 %227
  %229 = vadd.xlane.f32.xlu0 %v207
  %v230 = vpop.xlane.xlu0 %229
  %231 = vadd.xlane.f32.xlu0 %v208
  %v232 = vpop.xlane.xlu0 %231
  %233 = vadd.xlane.f32.xlu0 %v209
  %v234 = vpop.xlane.xlu0 %233
  %235 = vadd.xlane.f32.xlu0 %v210
  %v236 = vpop.xlane.xlu0 %235
  %237 = vadd.xlane.f32.xlu0 %v211
  %v238 = vpop.xlane.xlu0 %237
  %239 = vadd.xlane.f32.xlu0 %v212
  %v240 = vpop.xlane.xlu0 %239
  %241 = vadd.xlane.f32.xlu0 %v213
  %v242 = vpop.xlane.xlu0 %241
  %243 = vadd.xlane.f32.xlu0 %v214
  %v244 = vpop.xlane.xlu0 %243
  %245 = vadd.xlane.f32.xlu0 %v215
  %v246 = vpop.xlane.xlu0 %245
  %247 = vadd.xlane.f32.xlu0 %v216
  %v248 = vpop.xlane.xlu0 %247
  %v249 = vld [vmem:[%s2] sm:$0xff]
  %251 = vset.pattern.permute.xlu0 0
  %252 = vperm.xlu0 %251, %v249
  %v253 = vpop.permute.xlu0 %252
  %v254 = vperm.slane %v253, 0
  %v255 = vperm.slane %v253, 1
  %v256 = vperm.slane %v253, 2
  %v257 = vperm.slane %v253, 3
  %v258 = vperm.slane %v253, 4
  %v259 = vperm.slane %v253, 5
  %v260 = vperm.slane %v253, 6
  %v261 = vperm.slane %v253, 7
  %v270 = vadd.f32 %v218, %v254
  %v271 = vadd.f32 %v220, %v254
  %v272 = vadd.f32 %v222, %v255
  %v273 = vadd.f32 %v224, %v255
  %v274 = vadd.f32 %v226, %v256
  %v275 = vadd.f32 %v228, %v256
  %v276 = vadd.f32 %v230, %v257
  %v277 = vadd.f32 %v232, %v257
  %v278 = vadd.f32 %v234, %v258
  %v279 = vadd.f32 %v236, %v258
  %v280 = vadd.f32 %v238, %v259
  %v281 = vadd.f32 %v240, %v259
  %v282 = vadd.f32 %v242, %v260
  %v283 = vadd.f32 %v244, %v260
  %v284 = vadd.f32 %v246, %v261
  %v285 = vadd.f32 %v248, %v261
  %v286 = vtanh.pop %v270
  %v287 = vtanh.pop %v271
  %v288 = vtanh.pop %v272
  %v289 = vtanh.pop %v273
  %v290 = vtanh.pop %v274
  %v291 = vtanh.pop %v275
  %v292 = vtanh.pop %v276
  %v293 = vtanh.pop %v277
  %v294 = vtanh.pop %v278
  %v295 = vtanh.pop %v279
  %v296 = vtanh.pop %v280
  %v297 = vtanh.pop %v281
  %v298 = vtanh.pop %v282
  %v299 = vtanh.pop %v283
  %v300 = vtanh.pop %v284
  %v301 = vtanh.pop %v285
  %v302 = vlaneseq
  %v303 = vand.u32 %v302, 127
  %v304 = vstv %s19
  %vm305 = vcmp.lt.s32.totalorder %v303, %v304
  %322 = vset.pattern.permute.xlu0 0
  %323 = vperm.xlu0 %322, %v286
  %v324 = vpop.permute.xlu0 %323
  %325 = vset.pattern.permute.xlu0 0
  %326 = vperm.xlu0 %325, %v287
  %v327 = vpop.permute.xlu0 %326
  %328 = vset.pattern.permute.xlu0 0
  %329 = vperm.xlu0 %328, %v288
  %v330 = vpop.permute.xlu0 %329
  %331 = vset.pattern.permute.xlu0 0
  %332 = vperm.xlu0 %331, %v289
  %v333 = vpop.permute.xlu0 %332
  %334 = vset.pattern.permute.xlu0 0
  %335 = vperm.xlu0 %334, %v290
  %v336 = vpop.permute.xlu0 %335
  %337 = vset.pattern.permute.xlu0 0
  %338 = vperm.xlu0 %337, %v291
  %v339 = vpop.permute.xlu0 %338
  %340 = vset.pattern.permute.xlu0 0
  %341 = vperm.xlu0 %340, %v292
  %v342 = vpop.permute.xlu0 %341
  %343 = vset.pattern.permute.xlu0 0
  %344 = vperm.xlu0 %343, %v293
  %v345 = vpop.permute.xlu0 %344
  %346 = vset.pattern.permute.xlu0 0
  %347 = vperm.xlu0 %346, %v294
  %v348 = vpop.permute.xlu0 %347
  %349 = vset.pattern.permute.xlu0 0
  %350 = vperm.xlu0 %349, %v295
  %v351 = vpop.permute.xlu0 %350
  %352 = vset.pattern.permute.xlu0 0
  %353 = vperm.xlu0 %352, %v296
  %v354 = vpop.permute.xlu0 %353
  %355 = vset.pattern.permute.xlu0 0
  %356 = vperm.xlu0 %355, %v297
  %v357 = vpop.permute.xlu0 %356
  %358 = vset.pattern.permute.xlu0 0
  %359 = vperm.xlu0 %358, %v298
  %v360 = vpop.permute.xlu0 %359
  %361 = vset.pattern.permute.xlu0 0
  %362 = vperm.xlu0 %361, %v299
  %v363 = vpop.permute.xlu0 %362
  %364 = vset.pattern.permute.xlu0 0
  %365 = vperm.xlu0 %364, %v300
  %v366 = vpop.permute.xlu0 %365
  %367 = vset.pattern.permute.xlu0 0
  %368 = vperm.xlu0 %367, %v301
  %v369 = vpop.permute.xlu0 %368
  %v370 = vperm.slane %v324, %v303
  %v371 = vadd.s32 %v303, 4294967288
  %v372 = vperm.slane %v327, %v371
  %vm373 = vcmask 130112
  %v374 = vsel %vm373, %v372, %v370
  %v375 = vperm.slane %v330, %v303
  %v376 = vperm.slane %v333, %v371
  %v377 = vsel %vm373, %v376, %v375
  %v378 = vperm.slane %v336, %v303
  %v379 = vperm.slane %v339, %v371
  %v380 = vsel %vm373, %v379, %v378
  %v381 = vperm.slane %v342, %v303
  %v382 = vperm.slane %v345, %v371
  %v383 = vsel %vm373, %v382, %v381
  %v384 = vperm.slane %v348, %v303
  %v385 = vperm.slane %v351, %v371
  %v386 = vsel %vm373, %v385, %v384
  %v387 = vperm.slane %v354, %v303
  %v388 = vperm.slane %v357, %v371
  %v389 = vsel %vm373, %v388, %v387
  %v390 = vperm.slane %v360, %v303
  %v391 = vperm.slane %v363, %v371
  %v392 = vsel %vm373, %v391, %v390
  %v393 = vperm.slane %v366, %v303
  %v394 = vperm.slane %v369, %v371
  %v395 = vsel %vm373, %v394, %v393
  %vm396 = vcmask 1041409
  %v397 = vsel %vm396, %v377, %v374
  %vm398 = vcmask 1042434
  %v399 = vsel %vm398, %v380, %v397
  %vm400 = vcmask 1043459
  %v401 = vsel %vm400, %v383, %v399
  %vm402 = vcmask 1044484
  %v403 = vsel %vm402, %v386, %v401
  %vm404 = vcmask 1045509
  %v405 = vsel %vm404, %v389, %v403
  %vm406 = vcmask 1046534
  %v407 = vsel %vm406, %v392, %v405
  %vm408 = vcmask 1047559
  %v409 = vsel %vm408, %v395, %v407
  %v411 = vsel %vm305, %v409, -1e+30
  %vm412 = vcmask 130048
  %v413 = vsel %vm412, %v411, -inf
  %414 = vmax.xlane.f32.xlu0 %v413
  %v415 = vpop.xlane.xlu0 %414
  %v416 = vsub.f32 %v411, %v415
  %v417 = vmul.f32 %v416, 1.442695
  %v418 = vpow.pop %v417
  %v419 = vsel %vm412, %v418, 0.0
  %420 = vadd.xlane.f32.xlu0 %v419
  %v421 = vpop.xlane.xlu0 %420
  %v422 = vrcp.pop %v421
  %v423 = vmul.f32 %v418, %v422
  %v425 = vrot.slane %v423, 1
  %v426 = vrot.slane %v423, 2
  %v427 = vrot.slane %v423, 3
  %v428 = vrot.slane %v423, 4
  %v429 = vrot.slane %v423, 5
  %v430 = vrot.slane %v423, 6
  %v431 = vrot.slane %v423, 7
  %v432 = vsel %vm412, %v423, 0
  %434 = vmatpush.msra.mxu0 0.0
  %435 = vmatpush.msra.mxu0 0.0
  %436 = vmatpush.msra.mxu0 0.0
  %437 = vmatpush.msra.mxu0 0.0
  %438 = vmatpush.msra.mxu0 0.0
  %439 = vmatpush.msra.mxu0 0.0
  %440 = vmatpush.msra.mxu0 0.0
  %441 = vmatpush.msra.mxu0 0.0
  %442 = vmatpush.msra.mxu0 0.0
  %443 = vmatpush.msra.mxu0 0.0
  %444 = vmatpush.msra.mxu0 0.0
  %445 = vmatpush.msra.mxu0 0.0
  %446 = vmatpush.msra.mxu0 0.0
  %447 = vmatpush.msra.mxu0 0.0
  %448 = vmatpush.msra.mxu0 %v163
  %449 = vmatpush.msra.mxu0 %v161
  %450 = vmatmul.f32.gmra.mxu0 %v432
  %v451 = vpop.f32.mrf.mxu0
  %v452 = vadd.f32 0.0, %v451
  %453 = vdwg.mxu0
  %v454 = vsel %vm412, %v425, 0
  %456 = vmatpush.msra.mxu0 0.0
  %457 = vmatpush.msra.mxu0 0.0
  %458 = vmatpush.msra.mxu0 0.0
  %459 = vmatpush.msra.mxu0 0.0
  %460 = vmatpush.msra.mxu0 0.0
  %461 = vmatpush.msra.mxu0 0.0
  %462 = vmatpush.msra.mxu0 0.0
  %463 = vmatpush.msra.mxu0 0.0
  %464 = vmatpush.msra.mxu0 0.0
  %465 = vmatpush.msra.mxu0 0.0
  %466 = vmatpush.msra.mxu0 0.0
  %467 = vmatpush.msra.mxu0 0.0
  %468 = vmatpush.msra.mxu0 0.0
  %469 = vmatpush.msra.mxu0 0.0
  %470 = vmatpush.msra.mxu0 %v168
  %471 = vmatpush.msra.mxu0 %v166
  %472 = vmatmul.f32.gmra.mxu0 %v454
  %v473 = vpop.f32.mrf.mxu0
  %v474 = vadd.f32 0.0, %v473
  %475 = vdwg.mxu0
  %v476 = vsel %vm412, %v426, 0
  %478 = vmatpush.msra.mxu0 0.0
  %479 = vmatpush.msra.mxu0 0.0
  %480 = vmatpush.msra.mxu0 0.0
  %481 = vmatpush.msra.mxu0 0.0
  %482 = vmatpush.msra.mxu0 0.0
  %483 = vmatpush.msra.mxu0 0.0
  %484 = vmatpush.msra.mxu0 0.0
  %485 = vmatpush.msra.mxu0 0.0
  %486 = vmatpush.msra.mxu0 0.0
  %487 = vmatpush.msra.mxu0 0.0
  %488 = vmatpush.msra.mxu0 0.0
  %489 = vmatpush.msra.mxu0 0.0
  %490 = vmatpush.msra.mxu0 0.0
  %491 = vmatpush.msra.mxu0 0.0
  %492 = vmatpush.msra.mxu0 %v173
  %493 = vmatpush.msra.mxu0 %v171
  %494 = vmatmul.f32.gmra.mxu0 %v476
  %v495 = vpop.f32.mrf.mxu0
  %v496 = vadd.f32 0.0, %v495
  %497 = vdwg.mxu0
  %v498 = vsel %vm412, %v427, 0
  %500 = vmatpush.msra.mxu0 0.0
  %501 = vmatpush.msra.mxu0 0.0
  %502 = vmatpush.msra.mxu0 0.0
  %503 = vmatpush.msra.mxu0 0.0
  %504 = vmatpush.msra.mxu0 0.0
  %505 = vmatpush.msra.mxu0 0.0
  %506 = vmatpush.msra.mxu0 0.0
  %507 = vmatpush.msra.mxu0 0.0
  %508 = vmatpush.msra.mxu0 0.0
  %509 = vmatpush.msra.mxu0 0.0
  %510 = vmatpush.msra.mxu0 0.0
  %511 = vmatpush.msra.mxu0 0.0
  %512 = vmatpush.msra.mxu0 0.0
  %513 = vmatpush.msra.mxu0 0.0
  %514 = vmatpush.msra.mxu0 %v178
  %515 = vmatpush.msra.mxu0 %v176
  %516 = vmatmul.f32.gmra.mxu0 %v498
  %v517 = vpop.f32.mrf.mxu0
  %v518 = vadd.f32 0.0, %v517
  %519 = vdwg.mxu0
  %v520 = vsel %vm412, %v428, 0
  %522 = vmatpush.msra.mxu0 0.0
  %523 = vmatpush.msra.mxu0 0.0
  %524 = vmatpush.msra.mxu0 0.0
  %525 = vmatpush.msra.mxu0 0.0
  %526 = vmatpush.msra.mxu0 0.0
  %527 = vmatpush.msra.mxu0 0.0
  %528 = vmatpush.msra.mxu0 0.0
  %529 = vmatpush.msra.mxu0 0.0
  %530 = vmatpush.msra.mxu0 0.0
  %531 = vmatpush.msra.mxu0 0.0
  %532 = vmatpush.msra.mxu0 0.0
  %533 = vmatpush.msra.mxu0 0.0
  %534 = vmatpush.msra.mxu0 0.0
  %535 = vmatpush.msra.mxu0 0.0
  %536 = vmatpush.msra.mxu0 %v183
  %537 = vmatpush.msra.mxu0 %v181
  %538 = vmatmul.f32.gmra.mxu0 %v520
  %v539 = vpop.f32.mrf.mxu0
  %v540 = vadd.f32 0.0, %v539
  %541 = vdwg.mxu0
  %v542 = vsel %vm412, %v429, 0
  %544 = vmatpush.msra.mxu0 0.0
  %545 = vmatpush.msra.mxu0 0.0
  %546 = vmatpush.msra.mxu0 0.0
  %547 = vmatpush.msra.mxu0 0.0
  %548 = vmatpush.msra.mxu0 0.0
  %549 = vmatpush.msra.mxu0 0.0
  %550 = vmatpush.msra.mxu0 0.0
  %551 = vmatpush.msra.mxu0 0.0
  %552 = vmatpush.msra.mxu0 0.0
  %553 = vmatpush.msra.mxu0 0.0
  %554 = vmatpush.msra.mxu0 0.0
  %555 = vmatpush.msra.mxu0 0.0
  %556 = vmatpush.msra.mxu0 0.0
  %557 = vmatpush.msra.mxu0 0.0
  %558 = vmatpush.msra.mxu0 %v188
  %559 = vmatpush.msra.mxu0 %v186
  %560 = vmatmul.f32.gmra.mxu0 %v542
  %v561 = vpop.f32.mrf.mxu0
  %v562 = vadd.f32 0.0, %v561
  %563 = vdwg.mxu0
  %v564 = vsel %vm412, %v430, 0
  %566 = vmatpush.msra.mxu0 0.0
  %567 = vmatpush.msra.mxu0 0.0
  %568 = vmatpush.msra.mxu0 0.0
  %569 = vmatpush.msra.mxu0 0.0
  %570 = vmatpush.msra.mxu0 0.0
  %571 = vmatpush.msra.mxu0 0.0
  %572 = vmatpush.msra.mxu0 0.0
  %573 = vmatpush.msra.mxu0 0.0
  %574 = vmatpush.msra.mxu0 0.0
  %575 = vmatpush.msra.mxu0 0.0
  %576 = vmatpush.msra.mxu0 0.0
  %577 = vmatpush.msra.mxu0 0.0
  %578 = vmatpush.msra.mxu0 0.0
  %579 = vmatpush.msra.mxu0 0.0
  %580 = vmatpush.msra.mxu0 %v193
  %581 = vmatpush.msra.mxu0 %v191
  %582 = vmatmul.f32.gmra.mxu0 %v564
  %v583 = vpop.f32.mrf.mxu0
  %v584 = vadd.f32 0.0, %v583
  %585 = vdwg.mxu0
  %v586 = vsel %vm412, %v431, 0
  %588 = vmatpush.msra.mxu0 0.0
  %589 = vmatpush.msra.mxu0 0.0
  %590 = vmatpush.msra.mxu0 0.0
  %591 = vmatpush.msra.mxu0 0.0
  %592 = vmatpush.msra.mxu0 0.0
  %593 = vmatpush.msra.mxu0 0.0
  %594 = vmatpush.msra.mxu0 0.0
  %595 = vmatpush.msra.mxu0 0.0
  %596 = vmatpush.msra.mxu0 0.0
  %597 = vmatpush.msra.mxu0 0.0
  %598 = vmatpush.msra.mxu0 0.0
  %599 = vmatpush.msra.mxu0 0.0
  %600 = vmatpush.msra.mxu0 0.0
  %601 = vmatpush.msra.mxu0 0.0
  %602 = vmatpush.msra.mxu0 %v198
  %603 = vmatpush.msra.mxu0 %v196
  %604 = vmatmul.f32.gmra.mxu0 %v586
  %v605 = vpop.f32.mrf.mxu0
  %v606 = vadd.f32 0.0, %v605
  %607 = vdwg.mxu0
  %v616 = vrot.slane %v474, 7
  %v617 = vsel %vm396, %v616, %v452
  %v618 = vrot.slane %v496, 6
  %v619 = vsel %vm398, %v618, %v617
  %v620 = vrot.slane %v518, 5
  %v621 = vsel %vm400, %v620, %v619
  %v622 = vrot.slane %v540, 4
  %v623 = vsel %vm402, %v622, %v621
  %v624 = vrot.slane %v562, 3
  %v625 = vsel %vm404, %v624, %v623
  %v626 = vrot.slane %v584, 2
  %v627 = vsel %vm406, %v626, %v625
  %v628 = vrot.slane %v606, 1
  %v629 = vsel %vm408, %v628, %v627
  %631 = vst [vmem:[%s5] sm:$0xff] %v629
  // Predicated region
  $region18: #{base_c_forward.1} parent=0 // pred_check
    _
  $region19: #{base_c_forward.1} parent=0 // pred_check_branch
    %633 = sbr.rel (0) target = $region21
  $region20: #{base_c_forward.1} parent=0 // pred_region
    _
  $region21: #{base_c_forward.1} parent=0 // pred_fallthru
    _
  // Predicated region
  $region22: #{base_c_forward.1} parent=0 // pred_check
    _
  $region23: #{base_c_forward.1} parent=0 // pred_check_branch
    %635 = sbr.rel (0) target = $region25
  $region24: #{base_c_forward.1} parent=0 // pred_region
    _
  $region25: #{base_c_forward.1} parent=0 // pred_fallthru
    _

</llo_original>
